<compile_context>
chip_gen: v5e
topology: v5e:2x2
jax: 0.10.0
libtpu: 0.0.40
codegen_flags: <defaults>
</compile_context>

<pallas_src>
import functools

import jax
import jax.numpy as jnp
from jax import lax
from jax.experimental import pallas as pl
from jax.experimental.pallas import tpu as pltpu

EPS = 1e-5


def _build_masks(N, H, W):
    """[16, M] f32 boundary masks (9 used, padded to 16 sublanes).

    Row (dh+1)*3+(dw+1), lane m=(n,h,w): 1.0 iff (h+dh, w+dw) lies inside the
    image, else 0.0 (implements the zero padding and kills roll wrap-around).
    Pure constant (no runtime inputs) -> constant-folded, zero per-call cost.
    """
    M = N * H * W
    m_idx = jnp.arange(M, dtype=jnp.int32)
    h_idx = (m_idx // W) % H
    w_idx = m_idx % W
    rows = []
    for dh in (-1, 0, 1):
        h_ok = jnp.logical_and(h_idx + dh >= 0, h_idx + dh < H)
        for dw in (-1, 0, 1):
            w_ok = jnp.logical_and(w_idx + dw >= 0, w_idx + dw < W)
            rows.append(jnp.logical_and(h_ok, w_ok).astype(jnp.float32))
    masks = jnp.stack(rows, axis=0)                        # [9, M]
    return jnp.pad(masks, ((0, 16 - len(rows)), (0, 0)))   # [16, M]


def _im2col_3x3(x, masks, patch_ref, H, W):
    """Fill patch_ref[0:9*C, :] with the 3x3 / stride-1 / pad-1 im2col of x.

    x: [C, M], C a multiple of 8.  Rolls are factored: 2 row (dh) rolls build
    a [3C, M] stack, then 2 column (dw) rolls shift the whole stack -> 4 XLU
    rolls per call (was 8).  Every tap is masked and stored as one full
    (8,128)-aligned sublane block (single unmasked vst; v5e has 1 store slot).
    Patch row order is tap-major, channel-minor: row = ((dh+1)*3+(dw+1))*C + c.
    """
    C, M = x.shape
    stack = jnp.concatenate(
        [pltpu.roll(x, W % M, axis=1),          # dh = -1 : y[:,m] = x[:, m-W]
         x,                                     # dh =  0
         pltpu.roll(x, (M - W) % M, axis=1)],   # dh = +1 : y[:,m] = x[:, m+W]
        axis=0)                                 # [3C, M]
    for dw in (-1, 0, 1):
        rolled = stack if dw == 0 else pltpu.roll(stack, (-dw) % M, axis=1)
        for r in range(3):                      # r = dh + 1
            t = r * 3 + (dw + 1)
            patch_ref[t * C:(t + 1) * C, :] = (
                rolled[r * C:(r + 1) * C, :] * masks[t:t + 1, :])


def _bn_fold(s, gamma, beta, inv_m):
    """Training-mode BN folded to per-channel (scale, shift): y = s*scale+shift.

    One stacked cross-lane reduce covers sum and sum-of-squares.  var is
    clamped at 0 to guard one-pass cancellation (eps still added afterwards).
    """
    C = s.shape[0]
    stacked = jnp.concatenate([s, s * s], axis=0)            # [2C, M]
    sums = jnp.sum(stacked, axis=1, keepdims=True)           # [2C, 1]
    mean = sums[:C] * inv_m
    var = jnp.maximum(sums[C:] * inv_m - mean * mean, 0.0)   # biased batch var
    scale = gamma * lax.rsqrt(var + EPS)
    shift = beta - mean * scale
    return scale, shift


def residual_block_kernel(x_ref, mask_ref, w1_ref, w2_ref, w3_ref, pp_ref,
                          o_ref, patch_ref, *, N, H, W, Cin, Cp, Cout):
    """Whole residual block in one kernel invocation (all operands in VMEM).

    x_ref    : [N*Cin, H*W]   NCHW input with trailing dims flattened (free view)
    mask_ref : [16, M]        precomputed im2col boundary masks, M = N*H*W
    w1_ref   : [Cout, 9*Cp]   conv1 weight as im2col matmul matrix (no bias)
    w2_ref   : [Cout, 9*Cout] conv2 weight (bias omitted: cancelled by bn2)
    w3_ref   : [Cout, Cp]     conv3 (1x1 shortcut) weight
    pp_ref   : [Cout, 8]      packed per-channel params: b3,g1,be1,g2,be2,0,0,0
    o_ref    : [N, Cout, H*W] output (reshapes to NCHW for free in the wrapper)
    patch_ref: [9*max(Cp,Cout), M] VMEM scratch, reused by both im2cols
    """
    HW = H * W
    M = N * HW
    inv_m = 1.0 / M

    masks = mask_ref[...]                                    # [16, M]
    pp = pp_ref[...]                                         # [Cout, 8]
    b3, g1, be1, g2, be2 = (pp[:, i:i + 1] for i in range(5))

    # ---- in-register NCHW -> channels-first [Cp, M] relayout ----
    # Image n's channels occupy sublanes [n*Cin, (n+1)*Cin) of x_flat; a
    # sublane roll brings them to rows [0, Cin) and a lane-aligned concat lays
    # the images side by side along M.  Rows Cin..Cp then hold stale rows of
    # other images, but the matching weight columns (channel zero-padding of
    # w1 / w3) are exactly zero, so they never reach the output.
    x_flat = x_ref[...]                                      # [N*Cin, HW]
    R = N * Cin
    parts = [x_flat if n == 0 else pltpu.roll(x_flat, (-n * Cin) % R, axis=0)
             for n in range(N)]
    x = parts[0] if N == 1 else jnp.concatenate(parts, axis=1)   # [R, M]
    if R > Cp:
        x = x[:Cp, :]
    elif R < Cp:                                             # not hit at demo shape
        x = jnp.pad(x, ((0, Cp - R), (0, 0)))

    # ---- shortcut: conv3 (1x1) + bias (done early so x dies after conv1) ----
    res = jnp.dot(w3_ref[...], x, preferred_element_type=jnp.float32) + b3

    # ---- conv1 (fused im2col matmul) + bn1 + relu ----
    _im2col_3x3(x, masks, patch_ref, H, W)
    s1 = jnp.dot(w1_ref[...], patch_ref[0:9 * Cp, :],
                 preferred_element_type=jnp.float32)
    sc1, sh1 = _bn_fold(s1, g1, be1, inv_m)
    h1 = jnp.maximum(s1 * sc1 + sh1, 0.0)

    # ---- conv2 (bias exactly cancelled by bn2's mean subtract) + bn2 ----
    _im2col_3x3(h1, masks, patch_ref, H, W)
    s2 = jnp.dot(w2_ref[...], patch_ref[0:9 * Cout, :],
                 preferred_element_type=jnp.float32)
    sc2, sh2 = _bn_fold(s2, g2, be2, inv_m)
    h2 = s2 * sc2 + sh2

    # ---- add + relu; write straight into the NCHW-compatible layout ----
    out = jnp.maximum(h2 + res, 0.0)                         # [Cout, M]
    for n in range(N):
        o_ref[n] = out[:, n * HW:(n + 1) * HW]               # lane-aligned slices


def fold_params(params, N, H, W):
    """One-time parameter folding + constant mask build (outside the hot path)."""
    Cin, Cout = params["w1"].shape[2], params["w1"].shape[3]
    Cp = -(-Cin // 8) * 8                      # pad input channels to sublane mult
    w1p = jnp.pad(params["w1"], ((0, 0), (0, 0), (0, Cp - Cin), (0, 0)))
    pp = jnp.stack([params["b3"].reshape(-1), params["g1"].reshape(-1),
                    params["be1"].reshape(-1), params["g2"].reshape(-1),
                    params["be2"].reshape(-1)], axis=1)      # [Cout, 5]
    # conv2's bias b2 is intentionally dropped: bn2 subtracts the batch mean
    # immediately after conv2, which cancels a per-channel constant exactly.
    return dict(
        w1m=w1p.reshape(9 * Cp, Cout).T,                     # [Cout, 9*Cp]
        w2m=params["w2"].reshape(9 * Cout, Cout).T,          # [Cout, 9*Cout]
        w3m=jnp.pad(params["w3"], ((0, Cp - Cin), (0, 0))).T,  # [Cout, Cp]
        pp=jnp.pad(pp, ((0, 0), (0, 8 - pp.shape[1]))),      # [Cout, 8]
        masks=_build_masks(N, H, W),                         # [16, M] constant
    )


@jax.jit
def residual_block(x_nchw, folded):
    """Wrapper: only free bitcast views around the pallas_call (no transposes)."""
    N, Cin, H, W = x_nchw.shape
    HW = H * W
    M = N * HW
    Cout = folded["w1m"].shape[0]
    Cp = folded["w3m"].shape[1]

    x_flat = x_nchw.reshape(N * Cin, HW).astype(jnp.float32)   # free view

    vmem = pl.BlockSpec(memory_space=pltpu.MemorySpace.VMEM)
    kernel = functools.partial(residual_block_kernel, N=N, H=H, W=W,
                               Cin=Cin, Cp=Cp, Cout=Cout)
    out = pl.pallas_call(
        kernel,
        out_shape=jax.ShapeDtypeStruct((N, Cout, HW), jnp.float32),
        in_specs=[vmem] * 6,
        out_specs=vmem,
        scratch_shapes=[pltpu.VMEM((9 * max(Cp, Cout), M), jnp.float32)],
    )(x_flat, folded["masks"], folded["w1m"], folded["w2m"], folded["w3m"],
      folded["pp"])
    return out.reshape(N, Cout, H, W)                          # free view


def reference(x_nchw, params):
    """Pure-JAX reference replicating the PyTorch forward (training-mode BN)."""
    x = jnp.transpose(x_nchw, (0, 2, 3, 1)).astype(jnp.float32)
    dn = ("NHWC", "HWIO", "NHWC")

    def conv(h, w, pad):
        return jax.lax.conv_general_dilated(
            h, w, (1, 1), [(pad, pad), (pad, pad)], dimension_numbers=dn)

    def bn(h, g, b):
        mean = jnp.mean(h, axis=(0, 1, 2), keepdims=True)
        var = jnp.mean((h - mean) ** 2, axis=(0, 1, 2), keepdims=True)
        return ((h - mean) * jax.lax.rsqrt(var + EPS)
                * g.reshape(1, 1, 1, -1) + b.reshape(1, 1, 1, -1))

    out = conv(x, params["w1"], 1)                                 # conv1 (no bias)
    out = jnp.maximum(bn(out, params["g1"], params["be1"]), 0.0)   # bn1 + relu
    out = conv(out, params["w2"], 1) + params["b2"].reshape(1, 1, 1, -1)  # conv2
    out = bn(out, params["g2"], params["be2"])                     # bn2
    res = (jnp.einsum("nhwc,co->nhwo", x, params["w3"])
           + params["b3"].reshape(1, 1, 1, -1))                    # conv3 shortcut
    out = jnp.maximum(out + res, 0.0)                              # add + relu
    return jnp.transpose(out, (0, 3, 1, 2))


if __name__ == "__main__":
    N, Cin, H, W = 2, 4, 16, 16       # input_channels = 4
    Cout = 8                          # num_channels   = 8, use_1x1conv=True

    ks = jax.random.split(jax.random.PRNGKey(0), 10)
    params = dict(
        w1=0.1 * jax.random.normal(ks[0], (3, 3, Cin, Cout), jnp.float32),
        w2=0.1 * jax.random.normal(ks[1], (3, 3, Cout, Cout), jnp.float32),
        w3=0.1 * jax.random.normal(ks[2], (Cin, Cout), jnp.float32),
        b2=0.1 * jax.random.normal(ks[3], (1, Cout), jnp.float32),
        b3=0.1 * jax.random.normal(ks[4], (1, Cout), jnp.float32),
        g1=1.0 + 0.1 * jax.random.normal(ks[5], (1, Cout), jnp.float32),
        be1=0.1 * jax.random.normal(ks[6], (1, Cout), jnp.float32),
        g2=1.0 + 0.1 * jax.random.normal(ks[7], (1, Cout), jnp.float32),
        be2=0.1 * jax.random.normal(ks[8], (1, Cout), jnp.float32),
    )
    x = jax.random.normal(ks[9], (N, Cin, H, W), jnp.float32)

    folded = fold_params(params, N, H, W)
    out = jax.block_until_ready(residual_block(x, folded))
    ref = reference(x, params)

    assert out.shape == (N, Cout, H, W), out.shape
    err = float(jnp.max(jnp.abs(out - ref)))
    assert jnp.allclose(out, ref, atol=1e-4, rtol=1e-4), f"max abs err = {err}"
    print("KERNEL_OK")
</pallas_src>

<mosaic_0001>
module attributes {stable_mosaic.version = 11 : i64} {
  func.func @residual_block_kernel(%arg0: memref<8x256xf32, #tpu.memory_space<vmem>>, %arg1: memref<16x512xf32, #tpu.memory_space<vmem>>, %arg2: memref<8x72xf32, #tpu.memory_space<vmem>>, %arg3: memref<8x72xf32, #tpu.memory_space<vmem>>, %arg4: memref<8x8xf32, #tpu.memory_space<vmem>>, %arg5: memref<8x8xf32, #tpu.memory_space<vmem>>, %arg6: memref<2x8x256xf32, #tpu.memory_space<vmem>>, %arg7: memref<72x512xf32, #tpu.memory_space<vmem>>) attributes {dimension_semantics = [], scalar_prefetch = 0 : i64, scratch_operands = 1 : i64, tpu.core_type = #tpu.core_type<tc>} {
    %c0 = arith.constant 0 : index
    %c0_0 = arith.constant 0 : index
    %0 = vector.load %arg1[%c0, %c0_0] : memref<16x512xf32, #tpu.memory_space<vmem>>, vector<16x512xf32>
    %c0_1 = arith.constant 0 : index
    %c0_2 = arith.constant 0 : index
    %1 = vector.load %arg5[%c0_1, %c0_2] : memref<8x8xf32, #tpu.memory_space<vmem>>, vector<8x8xf32>
    %2 = vector.extract_strided_slice %1 {offsets = [0, 0], sizes = [8, 1], strides = [1, 1]} : vector<8x8xf32> to vector<8x1xf32>
    %3 = vector.extract_strided_slice %1 {offsets = [0, 1], sizes = [8, 1], strides = [1, 1]} : vector<8x8xf32> to vector<8x1xf32>
    %4 = vector.extract_strided_slice %1 {offsets = [0, 2], sizes = [8, 1], strides = [1, 1]} : vector<8x8xf32> to vector<8x1xf32>
    %5 = vector.extract_strided_slice %1 {offsets = [0, 3], sizes = [8, 1], strides = [1, 1]} : vector<8x8xf32> to vector<8x1xf32>
    %6 = vector.extract_strided_slice %1 {offsets = [0, 4], sizes = [8, 1], strides = [1, 1]} : vector<8x8xf32> to vector<8x1xf32>
    %c0_3 = arith.constant 0 : index
    %c0_4 = arith.constant 0 : index
    %7 = vector.load %arg0[%c0_3, %c0_4] : memref<8x256xf32, #tpu.memory_space<vmem>>, vector<8x256xf32>
    %c4_i32 = arith.constant 4 : i32
    %8 = tpu.dynamic_rotate %7 by %c4_i32 dim 0 : vector<8x256xf32>, i32 -> vector<8x256xf32>
    %9 = tpu.concatenate %7, %8 in 1 : vector<8x256xf32>, vector<8x256xf32> -> vector<8x512xf32>
    %c0_5 = arith.constant 0 : index
    %c0_6 = arith.constant 0 : index
    %10 = vector.load %arg4[%c0_5, %c0_6] : memref<8x8xf32, #tpu.memory_space<vmem>>, vector<8x8xf32>
    %cst = arith.constant dense<0.000000e+00> : vector<8x512xf32>
    %11 = tpu.matmul %10, %9, %cst {dimension_numbers = #tpu.dot_dimension_numbers<[1], [0], [0], [1], [0, 0, 1, 1], [], []>} : vector<8x8xf32>, vector<8x512xf32>, vector<8x512xf32> -> vector<8x512xf32>
    %12 = vector.broadcast %2 : vector<8x1xf32> to vector<8x512xf32>
    %13 = arith.addf %11, %12 : vector<8x512xf32>
    %c16_i32 = arith.constant 16 : i32
    %14 = tpu.dynamic_rotate %9 by %c16_i32 dim 1 : vector<8x512xf32>, i32 -> vector<8x512xf32>
    %c496_i32 = arith.constant 496 : i32
    %15 = tpu.dynamic_rotate %9 by %c496_i32 dim 1 : vector<8x512xf32>, i32 -> vector<8x512xf32>
    %16 = tpu.concatenate %14, %9, %15 in 0 : vector<8x512xf32>, vector<8x512xf32>, vector<8x512xf32> -> vector<24x512xf32>
    %c1_i32 = arith.constant 1 : i32
    %17 = tpu.dynamic_rotate %16 by %c1_i32 dim 1 : vector<24x512xf32>, i32 -> vector<24x512xf32>
    %18 = vector.extract_strided_slice %17 {offsets = [0, 0], sizes = [8, 512], strides = [1, 1]} : vector<24x512xf32> to vector<8x512xf32>
    %19 = vector.extract_strided_slice %0 {offsets = [0, 0], sizes = [1, 512], strides = [1, 1]} : vector<16x512xf32> to vector<1x512xf32>
    %20 = vector.broadcast %19 : vector<1x512xf32> to vector<8x512xf32>
    %21 = arith.mulf %18, %20 : vector<8x512xf32>
    %c0_7 = arith.constant 0 : index
    %c0_8 = arith.constant 0 : index
    %22 = vector.load %arg7[%c0_7, %c0_8] : memref<72x512xf32, #tpu.memory_space<vmem>>, vector<8x512xf32>
    tpu.vector_store %arg7[%c0_7, %c0_8], %21 {strides = array<i32>} : memref<72x512xf32, #tpu.memory_space<vmem>>, vector<8x512xf32>,
    %23 = vector.extract_strided_slice %17 {offsets = [8, 0], sizes = [8, 512], strides = [1, 1]} : vector<24x512xf32> to vector<8x512xf32>
    %24 = vector.extract_strided_slice %0 {offsets = [3, 0], sizes = [1, 512], strides = [1, 1]} : vector<16x512xf32> to vector<1x512xf32>
    %25 = vector.broadcast %24 : vector<1x512xf32> to vector<8x512xf32>
    %26 = arith.mulf %23, %25 : vector<8x512xf32>
    %c24 = arith.constant 24 : index
    %c0_9 = arith.constant 0 : index
    %27 = vector.load %arg7[%c24, %c0_9] : memref<72x512xf32, #tpu.memory_space<vmem>>, vector<8x512xf32>
    tpu.vector_store %arg7[%c24, %c0_9], %26 {strides = array<i32>} : memref<72x512xf32, #tpu.memory_space<vmem>>, vector<8x512xf32>,
    %28 = vector.extract_strided_slice %17 {offsets = [16, 0], sizes = [8, 512], strides = [1, 1]} : vector<24x512xf32> to vector<8x512xf32>
    %29 = vector.extract_strided_slice %0 {offsets = [6, 0], sizes = [1, 512], strides = [1, 1]} : vector<16x512xf32> to vector<1x512xf32>
    %30 = vector.broadcast %29 : vector<1x512xf32> to vector<8x512xf32>
    %31 = arith.mulf %28, %30 : vector<8x512xf32>
    %c48 = arith.constant 48 : index
    %c0_10 = arith.constant 0 : index
    %32 = vector.load %arg7[%c48, %c0_10] : memref<72x512xf32, #tpu.memory_space<vmem>>, vector<8x512xf32>
    tpu.vector_store %arg7[%c48, %c0_10], %31 {strides = array<i32>} : memref<72x512xf32, #tpu.memory_space<vmem>>, vector<8x512xf32>,
    %33 = vector.extract_strided_slice %16 {offsets = [0, 0], sizes = [8, 512], strides = [1, 1]} : vector<24x512xf32> to vector<8x512xf32>
    %34 = vector.extract_strided_slice %0 {offsets = [1, 0], sizes = [1, 512], strides = [1, 1]} : vector<16x512xf32> to vector<1x512xf32>
    %35 = vector.broadcast %34 : vector<1x512xf32> to vector<8x512xf32>
    %36 = arith.mulf %33, %35 : vector<8x512xf32>
    %c8 = arith.constant 8 : index
    %c0_11 = arith.constant 0 : index
    %37 = vector.load %arg7[%c8, %c0_11] : memref<72x512xf32, #tpu.memory_space<vmem>>, vector<8x512xf32>
    tpu.vector_store %arg7[%c8, %c0_11], %36 {strides = array<i32>} : memref<72x512xf32, #tpu.memory_space<vmem>>, vector<8x512xf32>,
    %38 = vector.extract_strided_slice %16 {offsets = [8, 0], sizes = [8, 512], strides = [1, 1]} : vector<24x512xf32> to vector<8x512xf32>
    %39 = vector.extract_strided_slice %0 {offsets = [4, 0], sizes = [1, 512], strides = [1, 1]} : vector<16x512xf32> to vector<1x512xf32>
    %40 = vector.broadcast %39 : vector<1x512xf32> to vector<8x512xf32>
    %41 = arith.mulf %38, %40 : vector<8x512xf32>
    %c32 = arith.constant 32 : index
    %c0_12 = arith.constant 0 : index
    %42 = vector.load %arg7[%c32, %c0_12] : memref<72x512xf32, #tpu.memory_space<vmem>>, vector<8x512xf32>
    tpu.vector_store %arg7[%c32, %c0_12], %41 {strides = array<i32>} : memref<72x512xf32, #tpu.memory_space<vmem>>, vector<8x512xf32>,
    %43 = vector.extract_strided_slice %16 {offsets = [16, 0], sizes = [8, 512], strides = [1, 1]} : vector<24x512xf32> to vector<8x512xf32>
    %44 = vector.extract_strided_slice %0 {offsets = [7, 0], sizes = [1, 512], strides = [1, 1]} : vector<16x512xf32> to vector<1x512xf32>
    %45 = vector.broadcast %44 : vector<1x512xf32> to vector<8x512xf32>
    %46 = arith.mulf %43, %45 : vector<8x512xf32>
    %c56 = arith.constant 56 : index
    %c0_13 = arith.constant 0 : index
    %47 = vector.load %arg7[%c56, %c0_13] : memref<72x512xf32, #tpu.memory_space<vmem>>, vector<8x512xf32>
    tpu.vector_store %arg7[%c56, %c0_13], %46 {strides = array<i32>} : memref<72x512xf32, #tpu.memory_space<vmem>>, vector<8x512xf32>,
    %c511_i32 = arith.constant 511 : i32
    %48 = tpu.dynamic_rotate %16 by %c511_i32 dim 1 : vector<24x512xf32>, i32 -> vector<24x512xf32>
    %49 = vector.extract_strided_slice %48 {offsets = [0, 0], sizes = [8, 512], strides = [1, 1]} : vector<24x512xf32> to vector<8x512xf32>
    %50 = vector.extract_strided_slice %0 {offsets = [2, 0], sizes = [1, 512], strides = [1, 1]} : vector<16x512xf32> to vector<1x512xf32>
    %51 = vector.broadcast %50 : vector<1x512xf32> to vector<8x512xf32>
    %52 = arith.mulf %49, %51 : vector<8x512xf32>
    %c16 = arith.constant 16 : index
    %c0_14 = arith.constant 0 : index
    %53 = vector.load %arg7[%c16, %c0_14] : memref<72x512xf32, #tpu.memory_space<vmem>>, vector<8x512xf32>
    tpu.vector_store %arg7[%c16, %c0_14], %52 {strides = array<i32>} : memref<72x512xf32, #tpu.memory_space<vmem>>, vector<8x512xf32>,
    %54 = vector.extract_strided_slice %48 {offsets = [8, 0], sizes = [8, 512], strides = [1, 1]} : vector<24x512xf32> to vector<8x512xf32>
    %55 = vector.extract_strided_slice %0 {offsets = [5, 0], sizes = [1, 512], strides = [1, 1]} : vector<16x512xf32> to vector<1x512xf32>
    %56 = vector.broadcast %55 : vector<1x512xf32> to vector<8x512xf32>
    %57 = arith.mulf %54, %56 : vector<8x512xf32>
    %c40 = arith.constant 40 : index
    %c0_15 = arith.constant 0 : index
    %58 = vector.load %arg7[%c40, %c0_15] : memref<72x512xf32, #tpu.memory_space<vmem>>, vector<8x512xf32>
    tpu.vector_store %arg7[%c40, %c0_15], %57 {strides = array<i32>} : memref<72x512xf32, #tpu.memory_space<vmem>>, vector<8x512xf32>,
    %59 = vector.extract_strided_slice %48 {offsets = [16, 0], sizes = [8, 512], strides = [1, 1]} : vector<24x512xf32> to vector<8x512xf32>
    %60 = vector.extract_strided_slice %0 {offsets = [8, 0], sizes = [1, 512], strides = [1, 1]} : vector<16x512xf32> to vector<1x512xf32>
    %61 = vector.broadcast %60 : vector<1x512xf32> to vector<8x512xf32>
    %62 = arith.mulf %59, %61 : vector<8x512xf32>
    %c64 = arith.constant 64 : index
    %c0_16 = arith.constant 0 : index
    %63 = vector.load %arg7[%c64, %c0_16] : memref<72x512xf32, #tpu.memory_space<vmem>>, vector<8x512xf32>
    tpu.vector_store %arg7[%c64, %c0_16], %62 {strides = array<i32>} : memref<72x512xf32, #tpu.memory_space<vmem>>, vector<8x512xf32>,
    %c0_17 = arith.constant 0 : index
    %c0_18 = arith.constant 0 : index
    %64 = vector.load %arg2[%c0_17, %c0_18] : memref<8x72xf32, #tpu.memory_space<vmem>>, vector<8x72xf32>
    %c0_19 = arith.constant 0 : index
    %c0_20 = arith.constant 0 : index
    %65 = vector.load %arg7[%c0_19, %c0_20] : memref<72x512xf32, #tpu.memory_space<vmem>>, vector<72x512xf32>
    %cst_21 = arith.constant dense<0.000000e+00> : vector<8x512xf32>
    %66 = tpu.matmul %64, %65, %cst_21 {dimension_numbers = #tpu.dot_dimension_numbers<[1], [0], [0], [1], [0, 0, 1, 1], [], []>} : vector<8x72xf32>, vector<72x512xf32>, vector<8x512xf32> -> vector<8x512xf32>
    %67 = arith.mulf %66, %66 : vector<8x512xf32>
    %68 = tpu.concatenate %66, %67 in 0 : vector<8x512xf32>, vector<8x512xf32> -> vector<16x512xf32>
    %cst_22 = arith.constant dense<0.000000e+00> : vector<16xf32>
    %69 = vector.multi_reduction <add>, %68, %cst_22 [1] : vector<16x512xf32> to vector<16xf32>
    %70 = vector.shape_cast %69 : vector<16xf32> to vector<16x1xf32>
    %71 = vector.extract_strided_slice %70 {offsets = [0, 0], sizes = [8, 1], strides = [1, 1]} : vector<16x1xf32> to vector<8x1xf32>
    %cst_23 = arith.constant 0.001953125 : f32
    %72 = vector.broadcast %cst_23 : f32 to vector<8x1xf32>
    %73 = arith.mulf %71, %72 : vector<8x1xf32>
    %74 = vector.extract_strided_slice %70 {offsets = [8, 0], sizes = [8, 1], strides = [1, 1]} : vector<16x1xf32> to vector<8x1xf32>
    %cst_24 = arith.constant 0.001953125 : f32
    %75 = vector.broadcast %cst_24 : f32 to vector<8x1xf32>
    %76 = arith.mulf %74, %75 : vector<8x1xf32>
    %77 = arith.mulf %73, %73 : vector<8x1xf32>
    %78 = arith.subf %76, %77 : vector<8x1xf32>
    %cst_25 = arith.constant 0.000000e+00 : f32
    %79 = vector.broadcast %cst_25 : f32 to vector<8x1xf32>
    %80 = arith.maximumf %78, %79 : vector<8x1xf32>
    %cst_26 = arith.constant 9.99999974E-6 : f32
    %81 = vector.broadcast %cst_26 : f32 to vector<8x1xf32>
    %82 = arith.addf %80, %81 : vector<8x1xf32>
    %83 = math.rsqrt %82 : vector<8x1xf32>
    %84 = arith.mulf %3, %83 : vector<8x1xf32>
    %85 = arith.mulf %73, %84 : vector<8x1xf32>
    %86 = arith.subf %4, %85 : vector<8x1xf32>
    %87 = vector.broadcast %84 : vector<8x1xf32> to vector<8x512xf32>
    %88 = arith.mulf %66, %87 : vector<8x512xf32>
    %89 = vector.broadcast %86 : vector<8x1xf32> to vector<8x512xf32>
    %90 = arith.addf %88, %89 : vector<8x512xf32>
    %cst_27 = arith.constant 0.000000e+00 : f32
    %91 = vector.broadcast %cst_27 : f32 to vector<8x512xf32>
    %92 = arith.maximumf %90, %91 : vector<8x512xf32>
    %c16_i32_28 = arith.constant 16 : i32
    %93 = tpu.dynamic_rotate %92 by %c16_i32_28 dim 1 : vector<8x512xf32>, i32 -> vector<8x512xf32>
    %c496_i32_29 = arith.constant 496 : i32
    %94 = tpu.dynamic_rotate %92 by %c496_i32_29 dim 1 : vector<8x512xf32>, i32 -> vector<8x512xf32>
    %95 = tpu.concatenate %93, %92, %94 in 0 : vector<8x512xf32>, vector<8x512xf32>, vector<8x512xf32> -> vector<24x512xf32>
    %c1_i32_30 = arith.constant 1 : i32
    %96 = tpu.dynamic_rotate %95 by %c1_i32_30 dim 1 : vector<24x512xf32>, i32 -> vector<24x512xf32>
    %97 = vector.extract_strided_slice %96 {offsets = [0, 0], sizes = [8, 512], strides = [1, 1]} : vector<24x512xf32> to vector<8x512xf32>
    %98 = vector.extract_strided_slice %0 {offsets = [0, 0], sizes = [1, 512], strides = [1, 1]} : vector<16x512xf32> to vector<1x512xf32>
    %99 = vector.broadcast %98 : vector<1x512xf32> to vector<8x512xf32>
    %100 = arith.mulf %97, %99 : vector<8x512xf32>
    %c0_31 = arith.constant 0 : index
    %c0_32 = arith.constant 0 : index
    %101 = vector.load %arg7[%c0_31, %c0_32] : memref<72x512xf32, #tpu.memory_space<vmem>>, vector<8x512xf32>
    tpu.vector_store %arg7[%c0_31, %c0_32], %100 {strides = array<i32>} : memref<72x512xf32, #tpu.memory_space<vmem>>, vector<8x512xf32>,
    %102 = vector.extract_strided_slice %96 {offsets = [8, 0], sizes = [8, 512], strides = [1, 1]} : vector<24x512xf32> to vector<8x512xf32>
    %103 = vector.extract_strided_slice %0 {offsets = [3, 0], sizes = [1, 512], strides = [1, 1]} : vector<16x512xf32> to vector<1x512xf32>
    %104 = vector.broadcast %103 : vector<1x512xf32> to vector<8x512xf32>
    %105 = arith.mulf %102, %104 : vector<8x512xf32>
    %c24_33 = arith.constant 24 : index
    %c0_34 = arith.constant 0 : index
    %106 = vector.load %arg7[%c24_33, %c0_34] : memref<72x512xf32, #tpu.memory_space<vmem>>, vector<8x512xf32>
    tpu.vector_store %arg7[%c24_33, %c0_34], %105 {strides = array<i32>} : memref<72x512xf32, #tpu.memory_space<vmem>>, vector<8x512xf32>,
    %107 = vector.extract_strided_slice %96 {offsets = [16, 0], sizes = [8, 512], strides = [1, 1]} : vector<24x512xf32> to vector<8x512xf32>
    %108 = vector.extract_strided_slice %0 {offsets = [6, 0], sizes = [1, 512], strides = [1, 1]} : vector<16x512xf32> to vector<1x512xf32>
    %109 = vector.broadcast %108 : vector<1x512xf32> to vector<8x512xf32>
    %110 = arith.mulf %107, %109 : vector<8x512xf32>
    %c48_35 = arith.constant 48 : index
    %c0_36 = arith.constant 0 : index
    %111 = vector.load %arg7[%c48_35, %c0_36] : memref<72x512xf32, #tpu.memory_space<vmem>>, vector<8x512xf32>
    tpu.vector_store %arg7[%c48_35, %c0_36], %110 {strides = array<i32>} : memref<72x512xf32, #tpu.memory_space<vmem>>, vector<8x512xf32>,
    %112 = vector.extract_strided_slice %95 {offsets = [0, 0], sizes = [8, 512], strides = [1, 1]} : vector<24x512xf32> to vector<8x512xf32>
    %113 = vector.extract_strided_slice %0 {offsets = [1, 0], sizes = [1, 512], strides = [1, 1]} : vector<16x512xf32> to vector<1x512xf32>
    %114 = vector.broadcast %113 : vector<1x512xf32> to vector<8x512xf32>
    %115 = arith.mulf %112, %114 : vector<8x512xf32>
    %c8_37 = arith.constant 8 : index
    %c0_38 = arith.constant 0 : index
    %116 = vector.load %arg7[%c8_37, %c0_38] : memref<72x512xf32, #tpu.memory_space<vmem>>, vector<8x512xf32>
    tpu.vector_store %arg7[%c8_37, %c0_38], %115 {strides = array<i32>} : memref<72x512xf32, #tpu.memory_space<vmem>>, vector<8x512xf32>,
    %117 = vector.extract_strided_slice %95 {offsets = [8, 0], sizes = [8, 512], strides = [1, 1]} : vector<24x512xf32> to vector<8x512xf32>
    %118 = vector.extract_strided_slice %0 {offsets = [4, 0], sizes = [1, 512], strides = [1, 1]} : vector<16x512xf32> to vector<1x512xf32>
    %119 = vector.broadcast %118 : vector<1x512xf32> to vector<8x512xf32>
    %120 = arith.mulf %117, %119 : vector<8x512xf32>
    %c32_39 = arith.constant 32 : index
    %c0_40 = arith.constant 0 : index
    %121 = vector.load %arg7[%c32_39, %c0_40] : memref<72x512xf32, #tpu.memory_space<vmem>>, vector<8x512xf32>
    tpu.vector_store %arg7[%c32_39, %c0_40], %120 {strides = array<i32>} : memref<72x512xf32, #tpu.memory_space<vmem>>, vector<8x512xf32>,
    %122 = vector.extract_strided_slice %95 {offsets = [16, 0], sizes = [8, 512], strides = [1, 1]} : vector<24x512xf32> to vector<8x512xf32>
    %123 = vector.extract_strided_slice %0 {offsets = [7, 0], sizes = [1, 512], strides = [1, 1]} : vector<16x512xf32> to vector<1x512xf32>
    %124 = vector.broadcast %123 : vector<1x512xf32> to vector<8x512xf32>
    %125 = arith.mulf %122, %124 : vector<8x512xf32>
    %c56_41 = arith.constant 56 : index
    %c0_42 = arith.constant 0 : index
    %126 = vector.load %arg7[%c56_41, %c0_42] : memref<72x512xf32, #tpu.memory_space<vmem>>, vector<8x512xf32>
    tpu.vector_store %arg7[%c56_41, %c0_42], %125 {strides = array<i32>} : memref<72x512xf32, #tpu.memory_space<vmem>>, vector<8x512xf32>,
    %c511_i32_43 = arith.constant 511 : i32
    %127 = tpu.dynamic_rotate %95 by %c511_i32_43 dim 1 : vector<24x512xf32>, i32 -> vector<24x512xf32>
    %128 = vector.extract_strided_slice %127 {offsets = [0, 0], sizes = [8, 512], strides = [1, 1]} : vector<24x512xf32> to vector<8x512xf32>
    %129 = vector.extract_strided_slice %0 {offsets = [2, 0], sizes = [1, 512], strides = [1, 1]} : vector<16x512xf32> to vector<1x512xf32>
    %130 = vector.broadcast %129 : vector<1x512xf32> to vector<8x512xf32>
    %131 = arith.mulf %128, %130 : vector<8x512xf32>
    %c16_44 = arith.constant 16 : index
    %c0_45 = arith.constant 0 : index
    %132 = vector.load %arg7[%c16_44, %c0_45] : memref<72x512xf32, #tpu.memory_space<vmem>>, vector<8x512xf32>
    tpu.vector_store %arg7[%c16_44, %c0_45], %131 {strides = array<i32>} : memref<72x512xf32, #tpu.memory_space<vmem>>, vector<8x512xf32>,
    %133 = vector.extract_strided_slice %127 {offsets = [8, 0], sizes = [8, 512], strides = [1, 1]} : vector<24x512xf32> to vector<8x512xf32>
    %134 = vector.extract_strided_slice %0 {offsets = [5, 0], sizes = [1, 512], strides = [1, 1]} : vector<16x512xf32> to vector<1x512xf32>
    %135 = vector.broadcast %134 : vector<1x512xf32> to vector<8x512xf32>
    %136 = arith.mulf %133, %135 : vector<8x512xf32>
    %c40_46 = arith.constant 40 : index
    %c0_47 = arith.constant 0 : index
    %137 = vector.load %arg7[%c40_46, %c0_47] : memref<72x512xf32, #tpu.memory_space<vmem>>, vector<8x512xf32>
    tpu.vector_store %arg7[%c40_46, %c0_47], %136 {strides = array<i32>} : memref<72x512xf32, #tpu.memory_space<vmem>>, vector<8x512xf32>,
    %138 = vector.extract_strided_slice %127 {offsets = [16, 0], sizes = [8, 512], strides = [1, 1]} : vector<24x512xf32> to vector<8x512xf32>
    %139 = vector.extract_strided_slice %0 {offsets = [8, 0], sizes = [1, 512], strides = [1, 1]} : vector<16x512xf32> to vector<1x512xf32>
    %140 = vector.broadcast %139 : vector<1x512xf32> to vector<8x512xf32>
    %141 = arith.mulf %138, %140 : vector<8x512xf32>
    %c64_48 = arith.constant 64 : index
    %c0_49 = arith.constant 0 : index
    %142 = vector.load %arg7[%c64_48, %c0_49] : memref<72x512xf32, #tpu.memory_space<vmem>>, vector<8x512xf32>
    tpu.vector_store %arg7[%c64_48, %c0_49], %141 {strides = array<i32>} : memref<72x512xf32, #tpu.memory_space<vmem>>, vector<8x512xf32>,
    %c0_50 = arith.constant 0 : index
    %c0_51 = arith.constant 0 : index
    %143 = vector.load %arg3[%c0_50, %c0_51] : memref<8x72xf32, #tpu.memory_space<vmem>>, vector<8x72xf32>
    %c0_52 = arith.constant 0 : index
    %c0_53 = arith.constant 0 : index
    %144 = vector.load %arg7[%c0_52, %c0_53] : memref<72x512xf32, #tpu.memory_space<vmem>>, vector<72x512xf32>
    %cst_54 = arith.constant dense<0.000000e+00> : vector<8x512xf32>
    %145 = tpu.matmul %143, %144, %cst_54 {dimension_numbers = #tpu.dot_dimension_numbers<[1], [0], [0], [1], [0, 0, 1, 1], [], []>} : vector<8x72xf32>, vector<72x512xf32>, vector<8x512xf32> -> vector<8x512xf32>
    %146 = arith.mulf %145, %145 : vector<8x512xf32>
    %147 = tpu.concatenate %145, %146 in 0 : vector<8x512xf32>, vector<8x512xf32> -> vector<16x512xf32>
    %cst_55 = arith.constant dense<0.000000e+00> : vector<16xf32>
    %148 = vector.multi_reduction <add>, %147, %cst_55 [1] : vector<16x512xf32> to vector<16xf32>
    %149 = vector.shape_cast %148 : vector<16xf32> to vector<16x1xf32>
    %150 = vector.extract_strided_slice %149 {offsets = [0, 0], sizes = [8, 1], strides = [1, 1]} : vector<16x1xf32> to vector<8x1xf32>
    %cst_56 = arith.constant 0.001953125 : f32
    %151 = vector.broadcast %cst_56 : f32 to vector<8x1xf32>
    %152 = arith.mulf %150, %151 : vector<8x1xf32>
    %153 = vector.extract_strided_slice %149 {offsets = [8, 0], sizes = [8, 1], strides = [1, 1]} : vector<16x1xf32> to vector<8x1xf32>
    %cst_57 = arith.constant 0.001953125 : f32
    %154 = vector.broadcast %cst_57 : f32 to vector<8x1xf32>
    %155 = arith.mulf %153, %154 : vector<8x1xf32>
    %156 = arith.mulf %152, %152 : vector<8x1xf32>
    %157 = arith.subf %155, %156 : vector<8x1xf32>
    %cst_58 = arith.constant 0.000000e+00 : f32
    %158 = vector.broadcast %cst_58 : f32 to vector<8x1xf32>
    %159 = arith.maximumf %157, %158 : vector<8x1xf32>
    %cst_59 = arith.constant 9.99999974E-6 : f32
    %160 = vector.broadcast %cst_59 : f32 to vector<8x1xf32>
    %161 = arith.addf %159, %160 : vector<8x1xf32>
    %162 = math.rsqrt %161 : vector<8x1xf32>
    %163 = arith.mulf %5, %162 : vector<8x1xf32>
    %164 = arith.mulf %152, %163 : vector<8x1xf32>
    %165 = arith.subf %6, %164 : vector<8x1xf32>
    %166 = vector.broadcast %163 : vector<8x1xf32> to vector<8x512xf32>
    %167 = arith.mulf %145, %166 : vector<8x512xf32>
    %168 = vector.broadcast %165 : vector<8x1xf32> to vector<8x512xf32>
    %169 = arith.addf %167, %168 : vector<8x512xf32>
    %170 = arith.addf %169, %13 : vector<8x512xf32>
    %cst_60 = arith.constant 0.000000e+00 : f32
    %171 = vector.broadcast %cst_60 : f32 to vector<8x512xf32>
    %172 = arith.maximumf %170, %171 : vector<8x512xf32>
    %173 = vector.extract_strided_slice %172 {offsets = [0, 0], sizes = [8, 256], strides = [1, 1]} : vector<8x512xf32> to vector<8x256xf32>
    %c0_61 = arith.constant 0 : index
    %c0_62 = arith.constant 0 : index
    %c0_63 = arith.constant 0 : index
    %174 = vector.load %arg6[%c0_61, %c0_62, %c0_63] : memref<2x8x256xf32, #tpu.memory_space<vmem>>, vector<1x8x256xf32>
    %175 = vector.shape_cast %174 : vector<1x8x256xf32> to vector<8x256xf32>
    %176 = vector.shape_cast %173 : vector<8x256xf32> to vector<1x8x256xf32>
    tpu.vector_store %arg6[%c0_61, %c0_62, %c0_63], %176 {strides = array<i32>} : memref<2x8x256xf32, #tpu.memory_space<vmem>>, vector<1x8x256xf32>,
    %177 = vector.extract_strided_slice %172 {offsets = [0, 256], sizes = [8, 256], strides = [1, 1]} : vector<8x512xf32> to vector<8x256xf32>
    %c1 = arith.constant 1 : index
    %c0_64 = arith.constant 0 : index
    %c0_65 = arith.constant 0 : index
    %178 = vector.load %arg6[%c1, %c0_64, %c0_65] : memref<2x8x256xf32, #tpu.memory_space<vmem>>, vector<1x8x256xf32>
    %179 = vector.shape_cast %178 : vector<1x8x256xf32> to vector<8x256xf32>
    %180 = vector.shape_cast %177 : vector<8x256xf32> to vector<1x8x256xf32>
    tpu.vector_store %arg6[%c1, %c0_64, %c0_65], %180 {strides = array<i32>} : memref<2x8x256xf32, #tpu.memory_space<vmem>>, vector<1x8x256xf32>,
    return
  }
}

</mosaic_0001>

<llo_original>
// kernel: residual_block.1
$region0: #{residual_block.1}
  #allocation0 [shape = 'u32[]', space=smem, size = 0x4, offset = 0x4, fixed_abs, tag = 'smem constant byte address 0x4 - core index']
  #allocation1 [shape = 'u32[72,128]{1,0:T(1,128)}', space=vmem, size = 0x9000, scoped, tag = 'internal scratch']
  #allocation2 [shape = 'f32[72,512]{1,0:T(8,128)}', space=vmem, size = 0x24000, scoped, tag = 'scratch operand']
  %s0 = inlined_call_operand.vmem [shape: f32[8,256], index: 0, kind: input, shape index: {}]
  %s1 = inlined_call_operand.vmem [shape: f32[16,512], index: 1, kind: input, shape index: {}]
  %s2 = inlined_call_operand.vmem [shape: f32[8,72], index: 2, kind: input, shape index: {}]
  %s3 = inlined_call_operand.vmem [shape: f32[8,72], index: 3, kind: input, shape index: {}]
  %s4 = inlined_call_operand.vmem [shape: f32[8,8], index: 4, kind: input, shape index: {}]
  %s5 = inlined_call_operand.vmem [shape: f32[8,8], index: 5, kind: input, shape index: {}]
  %s6 = inlined_call_operand.vmem [shape: f32[2,8,256], index: 6, kind: output, shape index: {}]
  %s7 = sld [smem:[#allocation0]]
  $region34: #{residual_block.1} parent=0
    _
  %s9 = ssub.s32 1, %s7
  %s10 = scalar_select 0, %s9, %s7
  // Predicated region
  $region2: #{residual_block.1} parent=0 // pred_check
    _
  $region3: #{residual_block.1} parent=0 // pred_check_branch
    %12 = sbr.rel (0) target = $region5
  $region4: #{residual_block.1} parent=0 // pred_region
    _
  $region5: #{residual_block.1} parent=0 // pred_fallthru
    _
  // Predicated region
  $region6: #{residual_block.1} parent=0 // pred_check
    _
  $region7: #{residual_block.1} parent=0 // pred_check_branch
    %14 = sbr.rel (0) target = $region9
  $region8: #{residual_block.1} parent=0 // pred_region
    _
  $region9: #{residual_block.1} parent=0 // pred_fallthru
    _
  // Predicated region
  $region10: #{residual_block.1} parent=0 // pred_check
    _
  $region11: #{residual_block.1} parent=0 // pred_check_branch
    %16 = sbr.rel (0) target = $region13
  $region12: #{residual_block.1} parent=0 // pred_region
    _
  $region13: #{residual_block.1} parent=0 // pred_fallthru
    _
  // Predicated region
  $region14: #{residual_block.1} parent=0 // pred_check
    _
  $region15: #{residual_block.1} parent=0 // pred_check_branch
    %18 = sbr.rel (0) target = $region17
  $region16: #{residual_block.1} parent=0 // pred_region
    _
  $region17: #{residual_block.1} parent=0 // pred_fallthru
    _
  // Predicated region
  $region18: #{residual_block.1} parent=0 // pred_check
    _
  $region19: #{residual_block.1} parent=0 // pred_check_branch
    %20 = sbr.rel (0) target = $region21
  $region20: #{residual_block.1} parent=0 // pred_region
    _
  $region21: #{residual_block.1} parent=0 // pred_fallthru
    _
  // Predicated region
  $region22: #{residual_block.1} parent=0 // pred_check
    _
  $region23: #{residual_block.1} parent=0 // pred_check_branch
    %22 = sbr.rel (0) target = $region25
  $region24: #{residual_block.1} parent=0 // pred_region
    _
  $region25: #{residual_block.1} parent=0 // pred_fallthru
    _
  %v23 = vld [vmem:[%s1] sm:$0xff]
  %v24 = vld [vmem:[%s1 + $0x8] sm:$0xff]
  %v25 = vld [vmem:[%s1 + $0x10] sm:$0xff]
  %v26 = vld [vmem:[%s1 + $0x18] sm:$0xff]
  %v27 = vld [vmem:[%s1 + $0x20] sm:$0xff]
  %v28 = vld [vmem:[%s1 + $0x28] sm:$0xff]
  %v29 = vld [vmem:[%s1 + $0x30] sm:$0xff]
  %v30 = vld [vmem:[%s1 + $0x38] sm:$0xff]
  %v31 = vld [vmem:[%s5] sm:$0xff]
  %v32 = vld [vmem:[%s0] sm:$0xff]
  %v33 = vld [vmem:[%s0 + $0x8] sm:$0xff]
  %v34 = vrot.slane %v32, 4
  %v35 = vrot.slane %v33, 4
  %v36 = vld [vmem:[%s4] sm:$0xff]
  %38 = vset.pattern.permute.xlu0 0
  %39 = vperm.xlu0 %38, %v31
  %v40 = vpop.permute.xlu0 %39
  %vm42 = vcmask 64512
  %v44 = vsel %vm42, %v36, 0
  %46 = vmatpush.msra.mxu0 0.0
  %47 = vmatpush.msra.mxu0 0.0
  %48 = vmatpush.msra.mxu0 0.0
  %49 = vmatpush.msra.mxu0 0.0
  %50 = vmatpush.msra.mxu0 0.0
  %51 = vmatpush.msra.mxu0 0.0
  %52 = vmatpush.msra.mxu0 0.0
  %53 = vmatpush.msra.mxu0 0.0
  %54 = vmatpush.msra.mxu0 0.0
  %55 = vmatpush.msra.mxu0 0.0
  %56 = vmatpush.msra.mxu0 0.0
  %57 = vmatpush.msra.mxu0 0.0
  %58 = vmatpush.msra.mxu0 0.0
  %59 = vmatpush.msra.mxu0 0.0
  %60 = vmatpush.msra.mxu0 0.0
  %61 = vmatpush.msra.mxu0 %v32
  %62 = vmatmul.f32.gmra.mxu0 %v44
  %v63 = vpop.f32.mrf.mxu0
  %v64 = vadd.f32 %v40, %v63
  %65 = vdwg.mxu0
  %66 = vmatpush.msra.mxu0 0.0
  %67 = vmatpush.msra.mxu0 0.0
  %68 = vmatpush.msra.mxu0 0.0
  %69 = vmatpush.msra.mxu0 0.0
  %70 = vmatpush.msra.mxu0 0.0
  %71 = vmatpush.msra.mxu0 0.0
  %72 = vmatpush.msra.mxu0 0.0
  %73 = vmatpush.msra.mxu0 0.0
  %74 = vmatpush.msra.mxu0 0.0
  %75 = vmatpush.msra.mxu0 0.0
  %76 = vmatpush.msra.mxu0 0.0
  %77 = vmatpush.msra.mxu0 0.0
  %78 = vmatpush.msra.mxu0 0.0
  %79 = vmatpush.msra.mxu0 0.0
  %80 = vmatpush.msra.mxu0 0.0
  %81 = vmatpush.msra.mxu0 %v33
  %82 = vmatmul.f32.gmra.mxu0 %v44
  %v83 = vpop.f32.mrf.mxu0
  %v84 = vadd.f32 %v40, %v83
  %85 = vdwg.mxu0
  %86 = vmatpush.msra.mxu0 0.0
  %87 = vmatpush.msra.mxu0 0.0
  %88 = vmatpush.msra.mxu0 0.0
  %89 = vmatpush.msra.mxu0 0.0
  %90 = vmatpush.msra.mxu0 0.0
  %91 = vmatpush.msra.mxu0 0.0
  %92 = vmatpush.msra.mxu0 0.0
  %93 = vmatpush.msra.mxu0 0.0
  %94 = vmatpush.msra.mxu0 0.0
  %95 = vmatpush.msra.mxu0 0.0
  %96 = vmatpush.msra.mxu0 0.0
  %97 = vmatpush.msra.mxu0 0.0
  %98 = vmatpush.msra.mxu0 0.0
  %99 = vmatpush.msra.mxu0 0.0
  %100 = vmatpush.msra.mxu0 0.0
  %101 = vmatpush.msra.mxu0 %v34
  %102 = vmatmul.f32.gmra.mxu0 %v44
  %v103 = vpop.f32.mrf.mxu0
  %v104 = vadd.f32 %v40, %v103
  %105 = vdwg.mxu0
  %106 = vmatpush.msra.mxu0 0.0
  %107 = vmatpush.msra.mxu0 0.0
  %108 = vmatpush.msra.mxu0 0.0
  %109 = vmatpush.msra.mxu0 0.0
  %110 = vmatpush.msra.mxu0 0.0
  %111 = vmatpush.msra.mxu0 0.0
  %112 = vmatpush.msra.mxu0 0.0
  %113 = vmatpush.msra.mxu0 0.0
  %114 = vmatpush.msra.mxu0 0.0
  %115 = vmatpush.msra.mxu0 0.0
  %116 = vmatpush.msra.mxu0 0.0
  %117 = vmatpush.msra.mxu0 0.0
  %118 = vmatpush.msra.mxu0 0.0
  %119 = vmatpush.msra.mxu0 0.0
  %120 = vmatpush.msra.mxu0 0.0
  %121 = vmatpush.msra.mxu0 %v35
  %122 = vmatmul.f32.gmra.mxu0 %v44
  %v123 = vpop.f32.mrf.mxu0
  %v124 = vadd.f32 %v40, %v123
  %125 = vdwg.mxu0
  %126 = vrot.lane.b32.xlu0 %v32, 16
  %v127 = vpop.permute.xlu0 %126
  %128 = vrot.lane.b32.xlu0 %v33, 16
  %v129 = vpop.permute.xlu0 %128
  %130 = vrot.lane.b32.xlu0 %v34, 16
  %v131 = vpop.permute.xlu0 %130
  %132 = vrot.lane.b32.xlu0 %v35, 16
  %v133 = vpop.permute.xlu0 %132
  %v134 = vlaneseq
  %v135 = vand.u32 %v134, 127
  %vm136 = vcmp.lt.s32.totalorder %v135, 16
  %v137 = vsel %vm136, %v131, %v133
  %v138 = vsel %vm136, %v129, %v131
  %v139 = vsel %vm136, %v127, %v129
  %v140 = vsel %vm136, %v133, %v127
  %141 = vrot.lane.b32.xlu0 %v32, 112
  %v142 = vpop.permute.xlu0 %141
  %143 = vrot.lane.b32.xlu0 %v33, 112
  %v144 = vpop.permute.xlu0 %143
  %145 = vrot.lane.b32.xlu0 %v34, 112
  %v146 = vpop.permute.xlu0 %145
  %147 = vrot.lane.b32.xlu0 %v35, 112
  %v148 = vpop.permute.xlu0 %147
  %vm149 = vcmp.lt.s32.totalorder %v135, 112
  %v150 = vsel %vm149, %v146, %v148
  %v151 = vsel %vm149, %v144, %v146
  %v152 = vsel %vm149, %v142, %v144
  %v153 = vsel %vm149, %v148, %v142
  %154 = vrot.lane.b32.xlu0 %v140, 1
  %v155 = vpop.permute.xlu0 %154
  %156 = vrot.lane.b32.xlu0 %v32, 1
  %v157 = vpop.permute.xlu0 %156
  %158 = vrot.lane.b32.xlu0 %v152, 1
  %v159 = vpop.permute.xlu0 %158
  %160 = vrot.lane.b32.xlu0 %v139, 1
  %v161 = vpop.permute.xlu0 %160
  %162 = vrot.lane.b32.xlu0 %v33, 1
  %v163 = vpop.permute.xlu0 %162
  %164 = vrot.lane.b32.xlu0 %v151, 1
  %v165 = vpop.permute.xlu0 %164
  %166 = vrot.lane.b32.xlu0 %v138, 1
  %v167 = vpop.permute.xlu0 %166
  %168 = vrot.lane.b32.xlu0 %v34, 1
  %v169 = vpop.permute.xlu0 %168
  %170 = vrot.lane.b32.xlu0 %v150, 1
  %v171 = vpop.permute.xlu0 %170
  %172 = vrot.lane.b32.xlu0 %v137, 1
  %v173 = vpop.permute.xlu0 %172
  %174 = vrot.lane.b32.xlu0 %v35, 1
  %v175 = vpop.permute.xlu0 %174
  %176 = vrot.lane.b32.xlu0 %v153, 1
  %v177 = vpop.permute.xlu0 %176
  %vm178 = vcmp.lt.s32.totalorder %v135, 1
  %v179 = vsel %vm178, %v167, %v173
  %v180 = vsel %vm178, %v169, %v175
  %v181 = vsel %vm178, %v171, %v177
  %v182 = vsel %vm178, %v161, %v167
  %v183 = vsel %vm178, %v163, %v169
  %v184 = vsel %vm178, %v165, %v171
  %v185 = vsel %vm178, %v155, %v161
  %v186 = vsel %vm178, %v157, %v163
  %v187 = vsel %vm178, %v159, %v165
  %v188 = vsel %vm178, %v173, %v155
  %v189 = vsel %vm178, %v175, %v157
  %v190 = vsel %vm178, %v177, %v159
  %v191 = vperm.slane %v23, 0
  %v192 = vperm.slane %v24, 0
  %v193 = vperm.slane %v25, 0
  %v194 = vperm.slane %v26, 0
  %v195 = vmul.f32 %v188, %v191
  %v196 = vmul.f32 %v185, %v192
  %v197 = vmul.f32 %v182, %v193
  %v198 = vmul.f32 %v179, %v194
  %199 = vst [vmem:[#allocation2] sm:$0xff] %v195
  %200 = vst [vmem:[#allocation2 + $0x8] sm:$0xff] %v196
  %201 = vst [vmem:[#allocation2 + $0x10] sm:$0xff] %v197
  %202 = vst [vmem:[#allocation2 + $0x18] sm:$0xff] %v198
  %v203 = vperm.slane %v23, 3
  %v204 = vperm.slane %v24, 3
  %v205 = vperm.slane %v25, 3
  %v206 = vperm.slane %v26, 3
  %v207 = vmul.f32 %v189, %v203
  %v208 = vmul.f32 %v186, %v204
  %v209 = vmul.f32 %v183, %v205
  %v210 = vmul.f32 %v180, %v206
  %211 = vst [vmem:[#allocation2 + $0x60] sm:$0xff] %v207
  %212 = vst [vmem:[#allocation2 + $0x68] sm:$0xff] %v208
  %213 = vst [vmem:[#allocation2 + $0x70] sm:$0xff] %v209
  %214 = vst [vmem:[#allocation2 + $0x78] sm:$0xff] %v210
  %v215 = vperm.slane %v23, 6
  %v216 = vperm.slane %v24, 6
  %v217 = vperm.slane %v25, 6
  %v218 = vperm.slane %v26, 6
  %v219 = vmul.f32 %v190, %v215
  %v220 = vmul.f32 %v187, %v216
  %v221 = vmul.f32 %v184, %v217
  %v222 = vmul.f32 %v181, %v218
  %223 = vst [vmem:[#allocation2 + $0xc0] sm:$0xff] %v219
  %224 = vst [vmem:[#allocation2 + $0xc8] sm:$0xff] %v220
  %225 = vst [vmem:[#allocation2 + $0xd0] sm:$0xff] %v221
  %226 = vst [vmem:[#allocation2 + $0xd8] sm:$0xff] %v222
  %v227 = vperm.slane %v23, 1
  %v228 = vperm.slane %v24, 1
  %v229 = vperm.slane %v25, 1
  %v230 = vperm.slane %v26, 1
  %v231 = vmul.f32 %v140, %v227
  %v232 = vmul.f32 %v139, %v228
  %v233 = vmul.f32 %v138, %v229
  %v234 = vmul.f32 %v137, %v230
  %235 = vst [vmem:[#allocation2 + $0x20] sm:$0xff] %v231
  %236 = vst [vmem:[#allocation2 + $0x28] sm:$0xff] %v232
  %237 = vst [vmem:[#allocation2 + $0x30] sm:$0xff] %v233
  %238 = vst [vmem:[#allocation2 + $0x38] sm:$0xff] %v234
  %v239 = vperm.slane %v23, 4
  %v240 = vperm.slane %v24, 4
  %v241 = vperm.slane %v25, 4
  %v242 = vperm.slane %v26, 4
  %v243 = vmul.f32 %v32, %v239
  %v244 = vmul.f32 %v33, %v240
  %v245 = vmul.f32 %v34, %v241
  %v246 = vmul.f32 %v35, %v242
  %247 = vst [vmem:[#allocation2 + $0x80] sm:$0xff] %v243
  %248 = vst [vmem:[#allocation2 + $0x88] sm:$0xff] %v244
  %249 = vst [vmem:[#allocation2 + $0x90] sm:$0xff] %v245
  %250 = vst [vmem:[#allocation2 + $0x98] sm:$0xff] %v246
  %v251 = vperm.slane %v23, 7
  %v252 = vperm.slane %v24, 7
  %v253 = vperm.slane %v25, 7
  %v254 = vperm.slane %v26, 7
  %v255 = vmul.f32 %v152, %v251
  %v256 = vmul.f32 %v151, %v252
  %v257 = vmul.f32 %v150, %v253
  %v258 = vmul.f32 %v153, %v254
  %259 = vst [vmem:[#allocation2 + $0xe0] sm:$0xff] %v255
  %260 = vst [vmem:[#allocation2 + $0xe8] sm:$0xff] %v256
  %261 = vst [vmem:[#allocation2 + $0xf0] sm:$0xff] %v257
  %262 = vst [vmem:[#allocation2 + $0xf8] sm:$0xff] %v258
  %263 = vrot.lane.b32.xlu0 %v140, 127
  %v264 = vpop.permute.xlu0 %263
  %265 = vrot.lane.b32.xlu0 %v32, 127
  %v266 = vpop.permute.xlu0 %265
  %267 = vrot.lane.b32.xlu0 %v152, 127
  %v268 = vpop.permute.xlu0 %267
  %269 = vrot.lane.b32.xlu0 %v139, 127
  %v270 = vpop.permute.xlu0 %269
  %271 = vrot.lane.b32.xlu0 %v33, 127
  %v272 = vpop.permute.xlu0 %271
  %273 = vrot.lane.b32.xlu0 %v151, 127
  %v274 = vpop.permute.xlu0 %273
  %275 = vrot.lane.b32.xlu0 %v138, 127
  %v276 = vpop.permute.xlu0 %275
  %277 = vrot.lane.b32.xlu0 %v34, 127
  %v278 = vpop.permute.xlu0 %277
  %279 = vrot.lane.b32.xlu0 %v150, 127
  %v280 = vpop.permute.xlu0 %279
  %281 = vrot.lane.b32.xlu0 %v137, 127
  %v282 = vpop.permute.xlu0 %281
  %283 = vrot.lane.b32.xlu0 %v35, 127
  %v284 = vpop.permute.xlu0 %283
  %285 = vrot.lane.b32.xlu0 %v153, 127
  %v286 = vpop.permute.xlu0 %285
  %vm287 = vcmp.lt.s32.totalorder %v135, 127
  %v288 = vsel %vm287, %v276, %v282
  %v289 = vsel %vm287, %v278, %v284
  %v290 = vsel %vm287, %v280, %v286
  %v291 = vsel %vm287, %v270, %v276
  %v292 = vsel %vm287, %v272, %v278
  %v293 = vsel %vm287, %v274, %v280
  %v294 = vsel %vm287, %v264, %v270
  %v295 = vsel %vm287, %v266, %v272
  %v296 = vsel %vm287, %v268, %v274
  %v297 = vsel %vm287, %v282, %v264
  %v298 = vsel %vm287, %v284, %v266
  %v299 = vsel %vm287, %v286, %v268
  %v300 = vperm.slane %v23, 2
  %v301 = vperm.slane %v24, 2
  %v302 = vperm.slane %v25, 2
  %v303 = vperm.slane %v26, 2
  %v304 = vmul.f32 %v294, %v300
  %v305 = vmul.f32 %v291, %v301
  %v306 = vmul.f32 %v288, %v302
  %v307 = vmul.f32 %v297, %v303
  %308 = vst [vmem:[#allocation2 + $0x40] sm:$0xff] %v304
  %309 = vst [vmem:[#allocation2 + $0x48] sm:$0xff] %v305
  %310 = vst [vmem:[#allocation2 + $0x50] sm:$0xff] %v306
  %311 = vst [vmem:[#allocation2 + $0x58] sm:$0xff] %v307
  %v312 = vperm.slane %v23, 5
  %v313 = vperm.slane %v24, 5
  %v314 = vperm.slane %v25, 5
  %v315 = vperm.slane %v26, 5
  %v316 = vmul.f32 %v295, %v312
  %v317 = vmul.f32 %v292, %v313
  %v318 = vmul.f32 %v289, %v314
  %v319 = vmul.f32 %v298, %v315
  %320 = vst [vmem:[#allocation2 + $0xa0] sm:$0xff] %v316
  %321 = vst [vmem:[#allocation2 + $0xa8] sm:$0xff] %v317
  %322 = vst [vmem:[#allocation2 + $0xb0] sm:$0xff] %v318
  %323 = vst [vmem:[#allocation2 + $0xb8] sm:$0xff] %v319
  %v324 = vperm.slane %v27, 0
  %v325 = vperm.slane %v28, 0
  %v326 = vperm.slane %v29, 0
  %v327 = vperm.slane %v30, 0
  %v328 = vmul.f32 %v296, %v324
  %v329 = vmul.f32 %v293, %v325
  %v330 = vmul.f32 %v290, %v326
  %v331 = vmul.f32 %v299, %v327
  %332 = vst [vmem:[#allocation2 + $0x100] sm:$0xff] %v328
  %333 = vst [vmem:[#allocation2 + $0x108] sm:$0xff] %v329
  %334 = vst [vmem:[#allocation2 + $0x110] sm:$0xff] %v330
  %335 = vst [vmem:[#allocation2 + $0x118] sm:$0xff] %v331
  %v336 = vld [vmem:[%s2] sm:$0xff]
  %v337 = vld [vmem:[#allocation2] sm:$0xff]
  %v338 = vld [vmem:[#allocation2 + $0x8] sm:$0xff]
  %v339 = vld [vmem:[#allocation2 + $0x10] sm:$0xff]
  %v340 = vld [vmem:[#allocation2 + $0x18] sm:$0xff]
  %v341 = vld [vmem:[#allocation2 + $0x20] sm:$0xff]
  %v342 = vld [vmem:[#allocation2 + $0x28] sm:$0xff]
  %v343 = vld [vmem:[#allocation2 + $0x30] sm:$0xff]
  %v344 = vld [vmem:[#allocation2 + $0x38] sm:$0xff]
  %v345 = vld [vmem:[#allocation2 + $0x40] sm:$0xff]
  %v346 = vld [vmem:[#allocation2 + $0x48] sm:$0xff]
  %v347 = vld [vmem:[#allocation2 + $0x50] sm:$0xff]
  %v348 = vld [vmem:[#allocation2 + $0x58] sm:$0xff]
  %v349 = vld [vmem:[#allocation2 + $0x60] sm:$0xff]
  %v350 = vld [vmem:[#allocation2 + $0x68] sm:$0xff]
  %v351 = vld [vmem:[#allocation2 + $0x70] sm:$0xff]
  %v352 = vld [vmem:[#allocation2 + $0x78] sm:$0xff]
  %v353 = vld [vmem:[#allocation2 + $0x80] sm:$0xff]
  %v354 = vld [vmem:[#allocation2 + $0x88] sm:$0xff]
  %v355 = vld [vmem:[#allocation2 + $0x90] sm:$0xff]
  %v356 = vld [vmem:[#allocation2 + $0x98] sm:$0xff]
  %v357 = vld [vmem:[#allocation2 + $0xa0] sm:$0xff]
  %v358 = vld [vmem:[#allocation2 + $0xa8] sm:$0xff]
  %v359 = vld [vmem:[#allocation2 + $0xb0] sm:$0xff]
  %v360 = vld [vmem:[#allocation2 + $0xb8] sm:$0xff]
  %v361 = vld [vmem:[#allocation2 + $0xc0] sm:$0xff]
  %v362 = vld [vmem:[#allocation2 + $0xc8] sm:$0xff]
  %v363 = vld [vmem:[#allocation2 + $0xd0] sm:$0xff]
  %v364 = vld [vmem:[#allocation2 + $0xd8] sm:$0xff]
  %v365 = vld [vmem:[#allocation2 + $0xe0] sm:$0xff]
  %v366 = vld [vmem:[#allocation2 + $0xe8] sm:$0xff]
  %v367 = vld [vmem:[#allocation2 + $0xf0] sm:$0xff]
  %v368 = vld [vmem:[#allocation2 + $0xf8] sm:$0xff]
  %v369 = vld [vmem:[#allocation2 + $0x100] sm:$0xff]
  %v370 = vld [vmem:[#allocation2 + $0x108] sm:$0xff]
  %v371 = vld [vmem:[#allocation2 + $0x110] sm:$0xff]
  %v372 = vld [vmem:[#allocation2 + $0x118] sm:$0xff]
  %vm373 = vcmask 588800
  %v375 = vsel %vm373, %v336, 0
  %377 = vmatpush.msra.mxu0 0.0
  %378 = vmatpush.msra.mxu0 0.0
  %379 = vmatpush.msra.mxu0 0.0
  %380 = vmatpush.msra.mxu0 0.0
  %381 = vmatpush.msra.mxu0 0.0
  %382 = vmatpush.msra.mxu0 0.0
  %383 = vmatpush.msra.mxu0 0.0
  %384 = vmatpush.msra.mxu0 %v369
  %385 = vmatpush.msra.mxu0 %v365
  %386 = vmatpush.msra.mxu0 %v361
  %387 = vmatpush.msra.mxu0 %v357
  %388 = vmatpush.msra.mxu0 %v353
  %389 = vmatpush.msra.mxu0 %v349
  %390 = vmatpush.msra.mxu0 %v345
  %391 = vmatpush.msra.mxu0 %v341
  %392 = vmatpush.msra.mxu0 %v337
  %393 = vmatmul.f32.gmra.mxu0 %v375
  %v394 = vpop.f32.mrf.mxu0
  %v395 = vadd.f32 0.0, %v394
  %396 = vdwg.mxu0
  %397 = vmatpush.msra.mxu0 0.0
  %398 = vmatpush.msra.mxu0 0.0
  %399 = vmatpush.msra.mxu0 0.0
  %400 = vmatpush.msra.mxu0 0.0
  %401 = vmatpush.msra.mxu0 0.0
  %402 = vmatpush.msra.mxu0 0.0
  %403 = vmatpush.msra.mxu0 0.0
  %404 = vmatpush.msra.mxu0 %v370
  %405 = vmatpush.msra.mxu0 %v366
  %406 = vmatpush.msra.mxu0 %v362
  %407 = vmatpush.msra.mxu0 %v358
  %408 = vmatpush.msra.mxu0 %v354
  %409 = vmatpush.msra.mxu0 %v350
  %410 = vmatpush.msra.mxu0 %v346
  %411 = vmatpush.msra.mxu0 %v342
  %412 = vmatpush.msra.mxu0 %v338
  %413 = vmatmul.f32.gmra.mxu0 %v375
  %v414 = vpop.f32.mrf.mxu0
  %v415 = vadd.f32 0.0, %v414
  %416 = vdwg.mxu0
  %417 = vmatpush.msra.mxu0 0.0
  %418 = vmatpush.msra.mxu0 0.0
  %419 = vmatpush.msra.mxu0 0.0
  %420 = vmatpush.msra.mxu0 0.0
  %421 = vmatpush.msra.mxu0 0.0
  %422 = vmatpush.msra.mxu0 0.0
  %423 = vmatpush.msra.mxu0 0.0
  %424 = vmatpush.msra.mxu0 %v371
  %425 = vmatpush.msra.mxu0 %v367
  %426 = vmatpush.msra.mxu0 %v363
  %427 = vmatpush.msra.mxu0 %v359
  %428 = vmatpush.msra.mxu0 %v355
  %429 = vmatpush.msra.mxu0 %v351
  %430 = vmatpush.msra.mxu0 %v347
  %431 = vmatpush.msra.mxu0 %v343
  %432 = vmatpush.msra.mxu0 %v339
  %433 = vmatmul.f32.gmra.mxu0 %v375
  %v434 = vpop.f32.mrf.mxu0
  %v435 = vadd.f32 0.0, %v434
  %436 = vdwg.mxu0
  %437 = vmatpush.msra.mxu0 0.0
  %438 = vmatpush.msra.mxu0 0.0
  %439 = vmatpush.msra.mxu0 0.0
  %440 = vmatpush.msra.mxu0 0.0
  %441 = vmatpush.msra.mxu0 0.0
  %442 = vmatpush.msra.mxu0 0.0
  %443 = vmatpush.msra.mxu0 0.0
  %444 = vmatpush.msra.mxu0 %v372
  %445 = vmatpush.msra.mxu0 %v368
  %446 = vmatpush.msra.mxu0 %v364
  %447 = vmatpush.msra.mxu0 %v360
  %448 = vmatpush.msra.mxu0 %v356
  %449 = vmatpush.msra.mxu0 %v352
  %450 = vmatpush.msra.mxu0 %v348
  %451 = vmatpush.msra.mxu0 %v344
  %452 = vmatpush.msra.mxu0 %v340
  %453 = vmatmul.f32.gmra.mxu0 %v375
  %v454 = vpop.f32.mrf.mxu0
  %v455 = vadd.f32 0.0, %v454
  %456 = vdwg.mxu0
  %v457 = vmul.f32 %v395, %v395
  %v458 = vmul.f32 %v415, %v415
  %v459 = vmul.f32 %v435, %v435
  %v460 = vmul.f32 %v455, %v455
  %v461 = vadd.f32 %v395, %v415
  %v462 = vadd.f32 %v461, %v435
  %v463 = vadd.f32 %v462, %v455
  %464 = vadd.xlane.f32.xlu0 %v463
  %v465 = vpop.xlane.xlu0 %464
  %v466 = vadd.f32 %v457, %v458
  %v467 = vadd.f32 %v466, %v459
  %v468 = vadd.f32 %v467, %v460
  %469 = vadd.xlane.f32.xlu0 %v468
  %v470 = vpop.xlane.xlu0 %469
  %v471 = vmul.f32 %v465, 0.001953125
  %v472 = vmul.f32 %v470, 0.001953125
  %v473 = vmul.f32 %v471, %v471
  %v474 = vsub.f32 %v472, %v473
  %v475 = vmax.f32 %v474, 0.0
  %v476 = vadd.f32 %v475, 1e-05
  %v477 = vrsqrt.pop %v476
  %v478 = vmul.f32 %v477, %v476
  %v479 = vmul.f32 %v478, %v477
  %v480 = vmul.f32 0.5, %v479
  %v481 = vsub.f32 1.5, %v480
  %v482 = vmul.f32 %v477, %v481
  %vm483 = vweird.f32 %v476
  %vm484 = vweird.f32 %v477
  %vm485 = vmor %vm483, %vm484
  %v486 = vsel %vm485, %v477, %v482
  %v487 = vmul.f32 %v31, %v486
  %v488 = vmul.f32 %v471, %v487
  %490 = vrot.lane.b32.xlu0 %v488, 1
  %v491 = vpop.permute.xlu0 %490
  %v493 = vsub.f32 %v31, %v491
  %495 = vset.pattern.permute.xlu0 1
  %496 = vperm.xlu0 %495, %v487
  %v497 = vpop.permute.xlu0 %496
  %v499 = vmul.f32 %v395, %v497
  %v500 = vmul.f32 %v415, %v497
  %v501 = vmul.f32 %v435, %v497
  %v502 = vmul.f32 %v455, %v497
  %504 = vset.pattern.permute.xlu0 2
  %505 = vperm.xlu0 %504, %v493
  %v506 = vpop.permute.xlu0 %505
  %v508 = vadd.f32 %v499, %v506
  %v509 = vadd.f32 %v500, %v506
  %v510 = vadd.f32 %v501, %v506
  %v511 = vadd.f32 %v502, %v506
  %v512 = vmax.f32 %v508, 0.0
  %v513 = vmax.f32 %v509, 0.0
  %v514 = vmax.f32 %v510, 0.0
  %v515 = vmax.f32 %v511, 0.0
  %516 = vrot.lane.b32.xlu0 %v512, 16
  %v517 = vpop.permute.xlu0 %516
  %518 = vrot.lane.b32.xlu0 %v513, 16
  %v519 = vpop.permute.xlu0 %518
  %520 = vrot.lane.b32.xlu0 %v514, 16
  %v521 = vpop.permute.xlu0 %520
  %522 = vrot.lane.b32.xlu0 %v515, 16
  %v523 = vpop.permute.xlu0 %522
  %v524 = vsel %vm136, %v521, %v523
  %v525 = vsel %vm136, %v519, %v521
  %v526 = vsel %vm136, %v517, %v519
  %v527 = vsel %vm136, %v523, %v517
  %528 = vrot.lane.b32.xlu0 %v512, 112
  %v529 = vpop.permute.xlu0 %528
  %530 = vrot.lane.b32.xlu0 %v513, 112
  %v531 = vpop.permute.xlu0 %530
  %532 = vrot.lane.b32.xlu0 %v514, 112
  %v533 = vpop.permute.xlu0 %532
  %534 = vrot.lane.b32.xlu0 %v515, 112
  %v535 = vpop.permute.xlu0 %534
  %v536 = vsel %vm149, %v533, %v535
  %v537 = vsel %vm149, %v531, %v533
  %v538 = vsel %vm149, %v529, %v531
  %v539 = vsel %vm149, %v535, %v529
  %540 = vrot.lane.b32.xlu0 %v527, 1
  %v541 = vpop.permute.xlu0 %540
  %542 = vrot.lane.b32.xlu0 %v512, 1
  %v543 = vpop.permute.xlu0 %542
  %544 = vrot.lane.b32.xlu0 %v538, 1
  %v545 = vpop.permute.xlu0 %544
  %546 = vrot.lane.b32.xlu0 %v526, 1
  %v547 = vpop.permute.xlu0 %546
  %548 = vrot.lane.b32.xlu0 %v513, 1
  %v549 = vpop.permute.xlu0 %548
  %550 = vrot.lane.b32.xlu0 %v537, 1
  %v551 = vpop.permute.xlu0 %550
  %552 = vrot.lane.b32.xlu0 %v525, 1
  %v553 = vpop.permute.xlu0 %552
  %554 = vrot.lane.b32.xlu0 %v514, 1
  %v555 = vpop.permute.xlu0 %554
  %556 = vrot.lane.b32.xlu0 %v536, 1
  %v557 = vpop.permute.xlu0 %556
  %558 = vrot.lane.b32.xlu0 %v524, 1
  %v559 = vpop.permute.xlu0 %558
  %560 = vrot.lane.b32.xlu0 %v515, 1
  %v561 = vpop.permute.xlu0 %560
  %562 = vrot.lane.b32.xlu0 %v539, 1
  %v563 = vpop.permute.xlu0 %562
  %v564 = vsel %vm178, %v553, %v559
  %v565 = vsel %vm178, %v555, %v561
  %v566 = vsel %vm178, %v557, %v563
  %v567 = vsel %vm178, %v547, %v553
  %v568 = vsel %vm178, %v549, %v555
  %v569 = vsel %vm178, %v551, %v557
  %v570 = vsel %vm178, %v541, %v547
  %v571 = vsel %vm178, %v543, %v549
  %v572 = vsel %vm178, %v545, %v551
  %v573 = vsel %vm178, %v559, %v541
  %v574 = vsel %vm178, %v561, %v543
  %v575 = vsel %vm178, %v563, %v545
  %v576 = vmul.f32 %v573, %v191
  %v577 = vmul.f32 %v570, %v192
  %v578 = vmul.f32 %v567, %v193
  %v579 = vmul.f32 %v564, %v194
  %580 = vst [vmem:[#allocation2] sm:$0xff] %v576
  %581 = vst [vmem:[#allocation2 + $0x8] sm:$0xff] %v577
  %582 = vst [vmem:[#allocation2 + $0x10] sm:$0xff] %v578
  %583 = vst [vmem:[#allocation2 + $0x18] sm:$0xff] %v579
  %v584 = vmul.f32 %v574, %v203
  %v585 = vmul.f32 %v571, %v204
  %v586 = vmul.f32 %v568, %v205
  %v587 = vmul.f32 %v565, %v206
  %588 = vst [vmem:[#allocation2 + $0x60] sm:$0xff] %v584
  %589 = vst [vmem:[#allocation2 + $0x68] sm:$0xff] %v585
  %590 = vst [vmem:[#allocation2 + $0x70] sm:$0xff] %v586
  %591 = vst [vmem:[#allocation2 + $0x78] sm:$0xff] %v587
  %v592 = vmul.f32 %v575, %v215
  %v593 = vmul.f32 %v572, %v216
  %v594 = vmul.f32 %v569, %v217
  %v595 = vmul.f32 %v566, %v218
  %596 = vst [vmem:[#allocation2 + $0xc0] sm:$0xff] %v592
  %597 = vst [vmem:[#allocation2 + $0xc8] sm:$0xff] %v593
  %598 = vst [vmem:[#allocation2 + $0xd0] sm:$0xff] %v594
  %599 = vst [vmem:[#allocation2 + $0xd8] sm:$0xff] %v595
  %v600 = vmul.f32 %v527, %v227
  %v601 = vmul.f32 %v526, %v228
  %v602 = vmul.f32 %v525, %v229
  %v603 = vmul.f32 %v524, %v230
  %604 = vst [vmem:[#allocation2 + $0x20] sm:$0xff] %v600
  %605 = vst [vmem:[#allocation2 + $0x28] sm:$0xff] %v601
  %606 = vst [vmem:[#allocation2 + $0x30] sm:$0xff] %v602
  %607 = vst [vmem:[#allocation2 + $0x38] sm:$0xff] %v603
  %v608 = vmul.f32 %v512, %v239
  %v609 = vmul.f32 %v513, %v240
  %v610 = vmul.f32 %v514, %v241
  %v611 = vmul.f32 %v515, %v242
  %612 = vst [vmem:[#allocation2 + $0x80] sm:$0xff] %v608
  %613 = vst [vmem:[#allocation2 + $0x88] sm:$0xff] %v609
  %614 = vst [vmem:[#allocation2 + $0x90] sm:$0xff] %v610
  %615 = vst [vmem:[#allocation2 + $0x98] sm:$0xff] %v611
  %v616 = vmul.f32 %v538, %v251
  %v617 = vmul.f32 %v537, %v252
  %v618 = vmul.f32 %v536, %v253
  %v619 = vmul.f32 %v539, %v254
  %620 = vst [vmem:[#allocation2 + $0xe0] sm:$0xff] %v616
  %621 = vst [vmem:[#allocation2 + $0xe8] sm:$0xff] %v617
  %622 = vst [vmem:[#allocation2 + $0xf0] sm:$0xff] %v618
  %623 = vst [vmem:[#allocation2 + $0xf8] sm:$0xff] %v619
  %624 = vrot.lane.b32.xlu0 %v527, 127
  %v625 = vpop.permute.xlu0 %624
  %626 = vrot.lane.b32.xlu0 %v512, 127
  %v627 = vpop.permute.xlu0 %626
  %628 = vrot.lane.b32.xlu0 %v538, 127
  %v629 = vpop.permute.xlu0 %628
  %630 = vrot.lane.b32.xlu0 %v526, 127
  %v631 = vpop.permute.xlu0 %630
  %632 = vrot.lane.b32.xlu0 %v513, 127
  %v633 = vpop.permute.xlu0 %632
  %634 = vrot.lane.b32.xlu0 %v537, 127
  %v635 = vpop.permute.xlu0 %634
  %636 = vrot.lane.b32.xlu0 %v525, 127
  %v637 = vpop.permute.xlu0 %636
  %638 = vrot.lane.b32.xlu0 %v514, 127
  %v639 = vpop.permute.xlu0 %638
  %640 = vrot.lane.b32.xlu0 %v536, 127
  %v641 = vpop.permute.xlu0 %640
  %642 = vrot.lane.b32.xlu0 %v524, 127
  %v643 = vpop.permute.xlu0 %642
  %644 = vrot.lane.b32.xlu0 %v515, 127
  %v645 = vpop.permute.xlu0 %644
  %646 = vrot.lane.b32.xlu0 %v539, 127
  %v647 = vpop.permute.xlu0 %646
  %v648 = vsel %vm287, %v637, %v643
  %v649 = vsel %vm287, %v639, %v645
  %v650 = vsel %vm287, %v641, %v647
  %v651 = vsel %vm287, %v631, %v637
  %v652 = vsel %vm287, %v633, %v639
  %v653 = vsel %vm287, %v635, %v641
  %v654 = vsel %vm287, %v625, %v631
  %v655 = vsel %vm287, %v627, %v633
  %v656 = vsel %vm287, %v629, %v635
  %v657 = vsel %vm287, %v643, %v625
  %v658 = vsel %vm287, %v645, %v627
  %v659 = vsel %vm287, %v647, %v629
  %v660 = vmul.f32 %v654, %v300
  %v661 = vmul.f32 %v651, %v301
  %v662 = vmul.f32 %v648, %v302
  %v663 = vmul.f32 %v657, %v303
  %664 = vst [vmem:[#allocation2 + $0x40] sm:$0xff] %v660
  %665 = vst [vmem:[#allocation2 + $0x48] sm:$0xff] %v661
  %666 = vst [vmem:[#allocation2 + $0x50] sm:$0xff] %v662
  %667 = vst [vmem:[#allocation2 + $0x58] sm:$0xff] %v663
  %v668 = vmul.f32 %v655, %v312
  %v669 = vmul.f32 %v652, %v313
  %v670 = vmul.f32 %v649, %v314
  %v671 = vmul.f32 %v658, %v315
  %672 = vst [vmem:[#allocation2 + $0xa0] sm:$0xff] %v668
  %673 = vst [vmem:[#allocation2 + $0xa8] sm:$0xff] %v669
  %674 = vst [vmem:[#allocation2 + $0xb0] sm:$0xff] %v670
  %675 = vst [vmem:[#allocation2 + $0xb8] sm:$0xff] %v671
  %v676 = vmul.f32 %v656, %v324
  %v677 = vmul.f32 %v653, %v325
  %v678 = vmul.f32 %v650, %v326
  %v679 = vmul.f32 %v659, %v327
  %680 = vst [vmem:[#allocation2 + $0x100] sm:$0xff] %v676
  %681 = vst [vmem:[#allocation2 + $0x108] sm:$0xff] %v677
  %682 = vst [vmem:[#allocation2 + $0x110] sm:$0xff] %v678
  %683 = vst [vmem:[#allocation2 + $0x118] sm:$0xff] %v679
  %v684 = vld [vmem:[%s3] sm:$0xff]
  %v685 = vld [vmem:[#allocation2] sm:$0xff]
  %v686 = vld [vmem:[#allocation2 + $0x8] sm:$0xff]
  %v687 = vld [vmem:[#allocation2 + $0x10] sm:$0xff]
  %v688 = vld [vmem:[#allocation2 + $0x18] sm:$0xff]
  %v689 = vld [vmem:[#allocation2 + $0x20] sm:$0xff]
  %v690 = vld [vmem:[#allocation2 + $0x28] sm:$0xff]
  %v691 = vld [vmem:[#allocation2 + $0x30] sm:$0xff]
  %v692 = vld [vmem:[#allocation2 + $0x38] sm:$0xff]
  %v693 = vld [vmem:[#allocation2 + $0x40] sm:$0xff]
  %v694 = vld [vmem:[#allocation2 + $0x48] sm:$0xff]
  %v695 = vld [vmem:[#allocation2 + $0x50] sm:$0xff]
  %v696 = vld [vmem:[#allocation2 + $0x58] sm:$0xff]
  %v697 = vld [vmem:[#allocation2 + $0x60] sm:$0xff]
  %v698 = vld [vmem:[#allocation2 + $0x68] sm:$0xff]
  %v699 = vld [vmem:[#allocation2 + $0x70] sm:$0xff]
  %v700 = vld [vmem:[#allocation2 + $0x78] sm:$0xff]
  %v701 = vld [vmem:[#allocation2 + $0x80] sm:$0xff]
  %v702 = vld [vmem:[#allocation2 + $0x88] sm:$0xff]
  %v703 = vld [vmem:[#allocation2 + $0x90] sm:$0xff]
  %v704 = vld [vmem:[#allocation2 + $0x98] sm:$0xff]
  %v705 = vld [vmem:[#allocation2 + $0xa0] sm:$0xff]
  %v706 = vld [vmem:[#allocation2 + $0xa8] sm:$0xff]
  %v707 = vld [vmem:[#allocation2 + $0xb0] sm:$0xff]
  %v708 = vld [vmem:[#allocation2 + $0xb8] sm:$0xff]
  %v709 = vld [vmem:[#allocation2 + $0xc0] sm:$0xff]
  %v710 = vld [vmem:[#allocation2 + $0xc8] sm:$0xff]
  %v711 = vld [vmem:[#allocation2 + $0xd0] sm:$0xff]
  %v712 = vld [vmem:[#allocation2 + $0xd8] sm:$0xff]
  %v713 = vld [vmem:[#allocation2 + $0xe0] sm:$0xff]
  %v714 = vld [vmem:[#allocation2 + $0xe8] sm:$0xff]
  %v715 = vld [vmem:[#allocation2 + $0xf0] sm:$0xff]
  %v716 = vld [vmem:[#allocation2 + $0xf8] sm:$0xff]
  %v717 = vld [vmem:[#allocation2 + $0x100] sm:$0xff]
  %v718 = vld [vmem:[#allocation2 + $0x108] sm:$0xff]
  %v719 = vld [vmem:[#allocation2 + $0x110] sm:$0xff]
  %v720 = vld [vmem:[#allocation2 + $0x118] sm:$0xff]
  %v722 = vsel %vm373, %v684, 0
  %724 = vmatpush.msra.mxu0 0.0
  %725 = vmatpush.msra.mxu0 0.0
  %726 = vmatpush.msra.mxu0 0.0
  %727 = vmatpush.msra.mxu0 0.0
  %728 = vmatpush.msra.mxu0 0.0
  %729 = vmatpush.msra.mxu0 0.0
  %730 = vmatpush.msra.mxu0 0.0
  %731 = vmatpush.msra.mxu0 %v717
  %732 = vmatpush.msra.mxu0 %v713
  %733 = vmatpush.msra.mxu0 %v709
  %734 = vmatpush.msra.mxu0 %v705
  %735 = vmatpush.msra.mxu0 %v701
  %736 = vmatpush.msra.mxu0 %v697
  %737 = vmatpush.msra.mxu0 %v693
  %738 = vmatpush.msra.mxu0 %v689
  %739 = vmatpush.msra.mxu0 %v685
  %740 = vmatmul.f32.gmra.mxu0 %v722
  %v741 = vpop.f32.mrf.mxu0
  %v742 = vadd.f32 0.0, %v741
  %743 = vdwg.mxu0
  %744 = vmatpush.msra.mxu0 0.0
  %745 = vmatpush.msra.mxu0 0.0
  %746 = vmatpush.msra.mxu0 0.0
  %747 = vmatpush.msra.mxu0 0.0
  %748 = vmatpush.msra.mxu0 0.0
  %749 = vmatpush.msra.mxu0 0.0
  %750 = vmatpush.msra.mxu0 0.0
  %751 = vmatpush.msra.mxu0 %v718
  %752 = vmatpush.msra.mxu0 %v714
  %753 = vmatpush.msra.mxu0 %v710
  %754 = vmatpush.msra.mxu0 %v706
  %755 = vmatpush.msra.mxu0 %v702
  %756 = vmatpush.msra.mxu0 %v698
  %757 = vmatpush.msra.mxu0 %v694
  %758 = vmatpush.msra.mxu0 %v690
  %759 = vmatpush.msra.mxu0 %v686
  %760 = vmatmul.f32.gmra.mxu0 %v722
  %v761 = vpop.f32.mrf.mxu0
  %v762 = vadd.f32 0.0, %v761
  %763 = vdwg.mxu0
  %764 = vmatpush.msra.mxu0 0.0
  %765 = vmatpush.msra.mxu0 0.0
  %766 = vmatpush.msra.mxu0 0.0
  %767 = vmatpush.msra.mxu0 0.0
  %768 = vmatpush.msra.mxu0 0.0
  %769 = vmatpush.msra.mxu0 0.0
  %770 = vmatpush.msra.mxu0 0.0
  %771 = vmatpush.msra.mxu0 %v719
  %772 = vmatpush.msra.mxu0 %v715
  %773 = vmatpush.msra.mxu0 %v711
  %774 = vmatpush.msra.mxu0 %v707
  %775 = vmatpush.msra.mxu0 %v703
  %776 = vmatpush.msra.mxu0 %v699
  %777 = vmatpush.msra.mxu0 %v695
  %778 = vmatpush.msra.mxu0 %v691
  %779 = vmatpush.msra.mxu0 %v687
  %780 = vmatmul.f32.gmra.mxu0 %v722
  %v781 = vpop.f32.mrf.mxu0
  %v782 = vadd.f32 0.0, %v781
  %783 = vdwg.mxu0
  %784 = vmatpush.msra.mxu0 0.0
  %785 = vmatpush.msra.mxu0 0.0
  %786 = vmatpush.msra.mxu0 0.0
  %787 = vmatpush.msra.mxu0 0.0
  %788 = vmatpush.msra.mxu0 0.0
  %789 = vmatpush.msra.mxu0 0.0
  %790 = vmatpush.msra.mxu0 0.0
  %791 = vmatpush.msra.mxu0 %v720
  %792 = vmatpush.msra.mxu0 %v716
  %793 = vmatpush.msra.mxu0 %v712
  %794 = vmatpush.msra.mxu0 %v708
  %795 = vmatpush.msra.mxu0 %v704
  %796 = vmatpush.msra.mxu0 %v700
  %797 = vmatpush.msra.mxu0 %v696
  %798 = vmatpush.msra.mxu0 %v692
  %799 = vmatpush.msra.mxu0 %v688
  %800 = vmatmul.f32.gmra.mxu0 %v722
  %v801 = vpop.f32.mrf.mxu0
  %v802 = vadd.f32 0.0, %v801
  %803 = vdwg.mxu0
  %v804 = vmul.f32 %v742, %v742
  %v805 = vmul.f32 %v762, %v762
  %v806 = vmul.f32 %v782, %v782
  %v807 = vmul.f32 %v802, %v802
  %v808 = vadd.f32 %v742, %v762
  %v809 = vadd.f32 %v808, %v782
  %v810 = vadd.f32 %v809, %v802
  %811 = vadd.xlane.f32.xlu0 %v810
  %v812 = vpop.xlane.xlu0 %811
  %v813 = vadd.f32 %v804, %v805
  %v814 = vadd.f32 %v813, %v806
  %v815 = vadd.f32 %v814, %v807
  %816 = vadd.xlane.f32.xlu0 %v815
  %v817 = vpop.xlane.xlu0 %816
  %v818 = vmul.f32 %v812, 0.001953125
  %v819 = vmul.f32 %v817, 0.001953125
  %v820 = vmul.f32 %v818, %v818
  %v821 = vsub.f32 %v819, %v820
  %v822 = vmax.f32 %v821, 0.0
  %v823 = vadd.f32 %v822, 1e-05
  %v824 = vrsqrt.pop %v823
  %v825 = vmul.f32 %v824, %v823
  %v826 = vmul.f32 %v825, %v824
  %v827 = vmul.f32 0.5, %v826
  %v828 = vsub.f32 1.5, %v827
  %v829 = vmul.f32 %v824, %v828
  %vm830 = vweird.f32 %v823
  %vm831 = vweird.f32 %v824
  %vm832 = vmor %vm830, %vm831
  %v833 = vsel %vm832, %v824, %v829
  %v834 = vmul.f32 %v31, %v833
  %v835 = vmul.f32 %v818, %v834
  %837 = vrot.lane.b32.xlu0 %v835, 1
  %v838 = vpop.permute.xlu0 %837
  %v840 = vsub.f32 %v31, %v838
  %842 = vset.pattern.permute.xlu0 3
  %843 = vperm.xlu0 %842, %v834
  %v844 = vpop.permute.xlu0 %843
  %v846 = vmul.f32 %v742, %v844
  %v847 = vmul.f32 %v762, %v844
  %v848 = vmul.f32 %v782, %v844
  %v849 = vmul.f32 %v802, %v844
  %851 = vset.pattern.permute.xlu0 4
  %852 = vperm.xlu0 %851, %v840
  %v853 = vpop.permute.xlu0 %852
  %v855 = vadd.f32 %v846, %v853
  %v856 = vadd.f32 %v847, %v853
  %v857 = vadd.f32 %v848, %v853
  %v858 = vadd.f32 %v849, %v853
  %v859 = vadd.f32 %v855, %v64
  %v860 = vadd.f32 %v856, %v84
  %v861 = vadd.f32 %v857, %v104
  %v862 = vadd.f32 %v858, %v124
  %v863 = vmax.f32 %v859, 0.0
  %v864 = vmax.f32 %v860, 0.0
  %v865 = vmax.f32 %v861, 0.0
  %v866 = vmax.f32 %v862, 0.0
  %867 = vst [vmem:[%s6] sm:$0xff] %v863
  %868 = vst [vmem:[%s6 + $0x8] sm:$0xff] %v864
  %s869 = scalar_lea.vmem %s6, 16
  %870 = vst [vmem:[%s869] sm:$0xff] %v865
  %871 = vst [vmem:[%s869 + $0x8] sm:$0xff] %v866
  // Predicated region
  $region26: #{residual_block.1} parent=0 // pred_check
    _
  $region27: #{residual_block.1} parent=0 // pred_check_branch
    %873 = sbr.rel (0) target = $region29
  $region28: #{residual_block.1} parent=0 // pred_region
    _
  $region29: #{residual_block.1} parent=0 // pred_fallthru
    _
  // Predicated region
  $region30: #{residual_block.1} parent=0 // pred_check
    _
  $region31: #{residual_block.1} parent=0 // pred_check_branch
    %875 = sbr.rel (0) target = $region33
  $region32: #{residual_block.1} parent=0 // pred_region
    _
  $region33: #{residual_block.1} parent=0 // pred_fallthru
    _

</llo_original>
